<compile_context>
chip_gen: v7x
topology: tpu7x:2x2x1
jax: 0.10.0
libtpu: 0.0.40
codegen_flags: <defaults>
</compile_context>

<pallas_src>
import functools
import math

import jax
import jax.numpy as jnp
from jax.experimental import pallas as pl
from jax.experimental.pallas import tpu as pltpu


TT_CAP = 8  # timesteps processed per grid step (kept at 8 so it also fits v7x's 64 MiB VMEM)


# ------------------------------------------------------------------------------------
# Kernel 1: PermutationMatrix (Sinkhorn) + masking, emitting fused weight layouts
# ------------------------------------------------------------------------------------
def _perm_mask_kernel(pbar_ref, lbar_ref,
                      wir_ref, whr_ref, wiz_ref, whz_ref, win_ref, whn_ref,
                      wi3_ref, wh2_ref, whn_out_ref,
                      *, temperature, unroll):
    H = pbar_ref.shape[0]
    p = pbar_ref[...]
    max_row = jnp.max(p, axis=1, keepdims=True)                       # (H, 1)
    m = jnp.exp(temperature * (p - max_row))                          # exp(T*(P - max_row @ ones))

    row = jax.lax.broadcasted_iota(jnp.int32, (H, H), 0)
    col = jax.lax.broadcasted_iota(jnp.int32, (H, H), 1)
    tril = (row >= col).astype(jnp.float32)
    lower_tri = jax.nn.sigmoid(lbar_ref[...]) * tril                  # sigmoid(L_bar) * tril

    # Sinkhorn normalization (unroll is a static Python int).  eps only matters for a
    # fully-underflowed row/col sum (would be inf/NaN in the torch reference too); it is
    # a deliberate tiny guard with no effect on healthy values.
    eps = 1e-30
    for _ in range(unroll):
        m = m / (jnp.sum(m, axis=1, keepdims=True) + eps)
        m = m / (jnp.sum(m, axis=0, keepdims=True) + eps)

    # output_lower = (M @ L @ M^T)^T = M @ L^T @ M^T  -- transpose-free via trans-B dots.
    dn = (((1,), (1,)), ((), ()))                                     # A @ B^T
    ml = jax.lax.dot_general(m, lower_tri, dn,
                             preferred_element_type=jnp.float32)      # M @ L^T
    out_lower = jax.lax.dot_general(ml, m, dn,
                                    preferred_element_type=jnp.float32)  # ... @ M^T

    # Emit the fused weight layouts directly (single lane-dense stores).
    wi3_ref[...] = jnp.concatenate(
        [wir_ref[...] * out_lower, wiz_ref[...] * out_lower, win_ref[...] * out_lower],
        axis=1)                                                       # (C, 3C) = [W_ir|W_iz|W_in]
    wh2_ref[...] = jnp.concatenate(
        [whr_ref[...] * out_lower, whz_ref[...] * out_lower], axis=1)  # (C, 2C) = [W_hr|W_hz]
    whn_out_ref[...] = whn_ref[...] * out_lower                       # (C, C)


def perm_masked_weights(p_bar, l_bar, gru_ws, temperature, unroll):
    C = p_bar.shape[0]
    vm = pl.BlockSpec(memory_space=pltpu.MemorySpace.VMEM)
    out_sds = (jax.ShapeDtypeStruct((C, 3 * C), jnp.float32),
               jax.ShapeDtypeStruct((C, 2 * C), jnp.float32),
               jax.ShapeDtypeStruct((C, C), jnp.float32))
    return pl.pallas_call(
        functools.partial(_perm_mask_kernel, temperature=temperature, unroll=unroll),
        out_shape=out_sds,
        in_specs=[vm] * 8,
        out_specs=tuple([vm] * 3),
        compiler_params=pltpu.CompilerParams(vmem_limit_bytes=32 * 1024 * 1024),
    )(p_bar, l_bar, *gru_ws)


# ------------------------------------------------------------------------------------
# Kernel 2 (fused): one-hot scatter + embedding matmuls + embed_input Linear + hoisted
# input-side GRU projections + permuted-GRU recurrence + gather + output Linear +
# masked BCE, loss accumulated in scratch, single (1,1) scalar output.
# ------------------------------------------------------------------------------------
def _dkt_fused_kernel(cl_ref, embed_ref, delta_ref, wembt_ref, bemb_ref,
                      wi3_ref, woute_ref, wh2_ref, whn_ref, wouth_ref, bout_ref,
                      loss_ref, h_scr, acc_scr, *, batch):
    s = pl.program_id(0)
    M = cl_ref.shape[0]                                               # TT * B rows this block
    B = batch
    TT = M // B
    C = whn_ref.shape[0]

    @pl.when(s == 0)
    def _():
        h_scr[...] = jnp.zeros_like(h_scr)
        acc_scr[...] = jnp.zeros_like(acc_scr)

    cl = cl_ref[...]                                                  # (M, 2) packed stream
    concept = cl[:, 0:1].astype(jnp.int32)                            # (M, 1) concept ids
    label = cl[:, 1:2]                                                # (M, 1) raw labels (-1/0/1)

    # ---- block-wide embedding / projection matmuls (one big MXU pass, no HBM hop) ----
    iota = jax.lax.broadcasted_iota(jnp.int32, (M, C), 1)
    onehot = (iota == concept).astype(jnp.float32)                    # scatter_(2, concept, label)
    signed = onehot * label

    rawembed = jnp.dot(onehot * jnp.abs(label), embed_ref[...],
                       preferred_element_type=jnp.float32)            # abs(input) @ embed_matrix
    rawdelta = jnp.dot(signed, delta_ref[...],
                       preferred_element_type=jnp.float32)            # input @ delta_matrix
    input_embed = jnp.dot(rawembed + rawdelta, wembt_ref[...],
                          preferred_element_type=jnp.float32) + bemb_ref[...]

    xproj = jnp.dot(input_embed, wi3_ref[...],
                    preferred_element_type=jnp.float32)               # x @ [W_ir|W_iz|W_in] (M,3C)
    lemb = jnp.dot(rawembed, woute_ref[...],
                   preferred_element_type=jnp.float32)                # rawembed @ W_out[:,:E]^T (M,1)

    wh2 = wh2_ref[...]                                                # (C, 2C) = [W_hr | W_hz]
    whn = whn_ref[...]                                                # (C, C)
    w_out_h = wouth_ref[...]                                          # (1, 1)
    b_out = bout_ref[...]                                             # (1, 1)

    # ---- sequential permuted-GRU recurrence, fully unrolled over TT timesteps ----
    h = h_scr[...]                                                    # (B, C) hidden carry
    acc = acc_scr[...]                                                # (B, 1) loss accumulator
    for i in range(TT):
        lo = i * B
        xp = xproj[lo:lo + B]                                         # (B, 3C)
        oh = onehot[lo:lo + B]                                        # (B, C)
        lab = label[lo:lo + B]                                        # (B, 1)
        le = lemb[lo:lo + B]                                          # (B, 1)

        relevant = jnp.sum(h * oh, axis=1, keepdims=True)             # gather(shifted_hidden, concept)

        h2 = jnp.dot(h, wh2, preferred_element_type=jnp.float32)      # one fused hidden matmul
        r = jax.nn.sigmoid(xp[:, 0:C] + h2[:, 0:C])
        z = jax.nn.sigmoid(xp[:, C:2 * C] + h2[:, C:2 * C])
        n = jnp.tanh(xp[:, 2 * C:3 * C]
                     + jnp.dot(r * h, whn, preferred_element_type=jnp.float32))
        h = h * z + (1.0 - z) * n

        # output_layer(concat(rawembed, relevant)) with the rawembed part precomputed
        logit = le + relevant * w_out_h + b_out                       # (B, 1)
        y = jnp.maximum(lab, 0.0)                                     # torch.clamp(labels, min=0)
        mask = (lab != 0.0).astype(jnp.float32)                       # mask_ones - (labels == 0)
        raw_loss = (jnp.maximum(logit, 0.0) - logit * y
                    + jnp.log1p(jnp.exp(-jnp.abs(logit))))            # stable BCEWithLogits
        acc = acc + raw_loss * mask

    h_scr[...] = h
    acc_scr[...] = acc

    @pl.when(s == pl.num_programs(0) - 1)
    def _():
        loss_ref[...] = jnp.sum(acc, keepdims=True)                   # single (1,1) reduce + store


def dkt_fused_forward(cl_flat, embed_matrix, delta_matrix, w_emb_t, b_emb,
                      wi3, wout_e_t, wh2, whn, w_out_h, b_out, t_pad, batch):
    C, E = embed_matrix.shape
    TT = TT_CAP
    grid = (t_pad // TT,)

    def const2(shape):
        return pl.BlockSpec(shape, lambda s: (0, 0))

    return pl.pallas_call(
        functools.partial(_dkt_fused_kernel, batch=batch),
        out_shape=jax.ShapeDtypeStruct((1, 1), jnp.float32),
        grid=grid,
        in_specs=[
            pl.BlockSpec((TT * batch, 2), lambda s: (s, 0)),  # packed [concept | label] rows
            const2((C, E)),                                   # embed_matrix
            const2((C, E)),                                   # delta_matrix
            const2((E, C)),                                   # embed_input.weight^T
            const2((1, C)),                                   # embed_input.bias
            const2((C, 3 * C)),                               # masked [W_ir | W_iz | W_in]
            const2((E, 1)),                                   # W_out[:, :E]^T
            const2((C, 2 * C)),                               # masked [W_hr | W_hz]
            const2((C, C)),                                   # masked W_hn
            const2((1, 1)),                                   # W_out[:, E] (hidden part)
            const2((1, 1)),                                   # output bias
        ],
        out_specs=pl.BlockSpec((1, 1), lambda s: (0, 0)),
        scratch_shapes=[pltpu.VMEM((batch, C), jnp.float32),  # hidden state carry
                        pltpu.VMEM((batch, 1), jnp.float32)], # loss accumulator
        compiler_params=pltpu.CompilerParams(
            dimension_semantics=("arbitrary",),
            vmem_limit_bytes=32 * 1024 * 1024),
    )(cl_flat, embed_matrix, delta_matrix, w_emb_t, b_emb,
      wi3, wout_e_t, wh2, whn, w_out_h, b_out)


# ------------------------------------------------------------------------------------
# PermutedDKT forward (glue)
# ------------------------------------------------------------------------------------
def permuted_dkt_forward(params, concept_input_untrans, labels_untrans, epoch,
                         init_temp, init_unroll):
    # (B, T) -> (T, B) like torch.transpose(..., 0, 1)
    concept_input = jnp.transpose(concept_input_untrans, (1, 0)).astype(jnp.int32)
    labels = jnp.transpose(labels_untrans, (1, 0)).astype(jnp.float32)
    T, B = concept_input.shape
    C, E = params["embed_matrix"].shape

    temperature = float((epoch // 10 + 1) * init_temp)
    unroll = int((epoch // 10 + 1) * init_unroll)

    wi3, wh2, whn = perm_masked_weights(
        params["p_bar"], params["l_bar"],
        (params["W_ir"], params["W_hr"], params["W_iz"],
         params["W_hz"], params["W_in"], params["W_hn"]),
        temperature, unroll)

    # Pad T to a multiple of TT_CAP with fully-masked (label==0) steps so the per-grid
    # step count never degrades to small divisors of an awkward T.  Padded steps are at
    # the end, contribute zero loss, and their hidden updates are never consumed.
    t_pad = ((T + TT_CAP - 1) // TT_CAP) * TT_CAP
    pad = t_pad - T
    concept_p = jnp.pad(concept_input, ((0, pad), (0, 0)))
    labels_p = jnp.pad(labels, ((0, pad), (0, 0)))

    # Pack concept ids + raw labels into one lane-friendly (T_pad*B, 2) stream.
    cl_flat = jnp.stack([concept_p.astype(jnp.float32), labels_p], axis=-1).reshape(
        t_pad * B, 2)

    loss_sum = dkt_fused_forward(
        cl_flat,
        params["embed_matrix"], params["delta_matrix"],
        params["W_embed_in"].T,                                       # (E, C)
        params["b_embed_in"][None, :],                                # (1, C)
        wi3,
        params["W_out"][:, :E].T,                                     # (E, 1)
        wh2, whn,
        params["W_out"][:, E:E + 1],                                  # (1, 1)
        params["b_out"][None, :],                                     # (1, 1)
        t_pad, B)

    # (raw_loss * mask).sum() / mask.sum()   (guarded against an all-padded batch)
    mask_sum = jnp.sum((labels != 0.0).astype(jnp.float32))
    return loss_sum[0, 0] / jnp.maximum(mask_sum, 1.0)


# ------------------------------------------------------------------------------------
# main
# ------------------------------------------------------------------------------------
if __name__ == "__main__":
    B, T = 8, 8               # students, questions
    C, E = 16, 32             # n_concepts (== GRU hidden size), embed_dim
    init_temp, init_unroll, epoch = 2.0, 3, 0

    key = jax.random.PRNGKey(0)
    ks = jax.random.split(key, 16)

    def kaiming_uniform(k, shape, a, fan_in):
        bound = math.sqrt(6.0 / ((1.0 + a * a) * fan_in))
        return jax.random.uniform(k, shape, jnp.float32, -bound, bound)

    def kaiming_normal_fanout(k, shape, a, fan_out):
        std = math.sqrt(2.0 / ((1.0 + a * a) * fan_out))
        return std * jax.random.normal(k, shape, jnp.float32)

    def linear_uniform(k, shape, fan_in):
        bound = 1.0 / math.sqrt(fan_in)
        return jax.random.uniform(k, shape, jnp.float32, -bound, bound)

    params = {
        # PermutationMatrix
        "p_bar": kaiming_uniform(ks[0], (C, C), math.sqrt(C), C),
        "l_bar": 0.1 * jax.random.normal(ks[1], (C, C), jnp.float32),
        # PermutedGru weights
        "W_ir": kaiming_normal_fanout(ks[2], (C, C), math.sqrt(C), C),
        "W_hr": kaiming_normal_fanout(ks[3], (C, C), math.sqrt(C), C),
        "W_iz": kaiming_normal_fanout(ks[4], (C, C), math.sqrt(C), C),
        "W_hz": kaiming_normal_fanout(ks[5], (C, C), math.sqrt(C), C),
        "W_in": kaiming_normal_fanout(ks[6], (C, C), math.sqrt(C), C),
        "W_hn": kaiming_normal_fanout(ks[7], (C, C), math.sqrt(C), C),
        # DKT embeddings
        "embed_matrix": kaiming_uniform(ks[8], (C, E), math.sqrt(E), E),
        "delta_matrix": kaiming_uniform(ks[9], (C, E), math.sqrt(E), E),
        # embed_input: nn.Linear(E, C)  (torch weight layout (C, E))
        "W_embed_in": linear_uniform(ks[10], (C, E), E),
        "b_embed_in": linear_uniform(ks[11], (C,), E),
        # output_layer: nn.Linear(E + 1, 1)
        "W_out": linear_uniform(ks[12], (1, E + 1), E + 1),
        "b_out": linear_uniform(ks[13], (1,), E + 1),
    }

    concept_input_untrans = jax.random.randint(ks[14], (B, T), 0, C, dtype=jnp.int32)
    labels_untrans = jax.random.randint(ks[15], (B, T), -1, 2, dtype=jnp.int32)  # {-1, 0, 1}

    loss = permuted_dkt_forward(params, concept_input_untrans, labels_untrans,
                                epoch, init_temp, init_unroll)
    loss = jax.block_until_ready(loss)
    assert jnp.isfinite(loss), "loss is not finite"
    print("KERNEL_OK")
</pallas_src>

<mosaic_0001>
module attributes {stable_mosaic.version = 11 : i64} {
  func.func @_perm_mask_kernel(%arg0: memref<16x16xf32, #tpu.memory_space<vmem>>, %arg1: memref<16x16xf32, #tpu.memory_space<vmem>>, %arg2: memref<16x16xf32, #tpu.memory_space<vmem>>, %arg3: memref<16x16xf32, #tpu.memory_space<vmem>>, %arg4: memref<16x16xf32, #tpu.memory_space<vmem>>, %arg5: memref<16x16xf32, #tpu.memory_space<vmem>>, %arg6: memref<16x16xf32, #tpu.memory_space<vmem>>, %arg7: memref<16x16xf32, #tpu.memory_space<vmem>>, %arg8: memref<16x48xf32, #tpu.memory_space<vmem>>, %arg9: memref<16x32xf32, #tpu.memory_space<vmem>>, %arg10: memref<16x16xf32, #tpu.memory_space<vmem>>) attributes {dimension_semantics = [], scalar_prefetch = 0 : i64, scratch_operands = 0 : i64, tpu.core_type = #tpu.core_type<tc>} {
    %c0 = arith.constant 0 : index
    %c0_0 = arith.constant 0 : index
    %0 = vector.load %arg0[%c0, %c0_0] : memref<16x16xf32, #tpu.memory_space<vmem>>, vector<16x16xf32>
    %cst = arith.constant dense<0xFF800000> : vector<16xf32>
    %1 = vector.multi_reduction <maximumf>, %0, %cst [1] : vector<16x16xf32> to vector<16xf32>
    %2 = vector.shape_cast %1 : vector<16xf32> to vector<16x1xf32>
    %3 = vector.broadcast %2 : vector<16x1xf32> to vector<16x16xf32>
    %4 = arith.subf %0, %3 : vector<16x16xf32>
    %cst_1 = arith.constant 2.000000e+00 : f32
    %5 = vector.broadcast %cst_1 : f32 to vector<16x16xf32>
    %6 = arith.mulf %5, %4 : vector<16x16xf32>
    %7 = math.exp %6 : vector<16x16xf32>
    %8 = tpu.iota {dimensions = array<i32: 0>} : vector<16x16xi32>
    %9 = tpu.iota {dimensions = array<i32: 1>} : vector<16x16xi32>
    %10 = arith.cmpi sge, %8, %9 : vector<16x16xi32>
    %11 = arith.extui %10 : vector<16x16xi1> to vector<16x16xi32>
    %12 = arith.sitofp %11 : vector<16x16xi32> to vector<16x16xf32>
    %c0_2 = arith.constant 0 : index
    %c0_3 = arith.constant 0 : index
    %13 = vector.load %arg1[%c0_2, %c0_3] : memref<16x16xf32, #tpu.memory_space<vmem>>, vector<16x16xf32>
    %14 = arith.negf %13 : vector<16x16xf32>
    %15 = math.exp %14 : vector<16x16xf32>
    %cst_4 = arith.constant 1.000000e+00 : f32
    %16 = vector.broadcast %cst_4 : f32 to vector<16x16xf32>
    %17 = arith.addf %16, %15 : vector<16x16xf32>
    %18 = arith.divf %16, %17 : vector<16x16xf32>
    %19 = arith.mulf %18, %12 : vector<16x16xf32>
    %cst_5 = arith.constant dense<0.000000e+00> : vector<16xf32>
    %20 = vector.multi_reduction <add>, %7, %cst_5 [1] : vector<16x16xf32> to vector<16xf32>
    %21 = vector.shape_cast %20 : vector<16xf32> to vector<16x1xf32>
    %cst_6 = arith.constant 1.000000e-30 : f32
    %22 = vector.broadcast %cst_6 : f32 to vector<16x1xf32>
    %23 = arith.addf %21, %22 : vector<16x1xf32>
    %24 = vector.broadcast %23 : vector<16x1xf32> to vector<16x16xf32>
    %25 = arith.divf %7, %24 : vector<16x16xf32>
    %cst_7 = arith.constant dense<0.000000e+00> : vector<16xf32>
    %26 = vector.multi_reduction <add>, %25, %cst_7 [0] : vector<16x16xf32> to vector<16xf32>
    %27 = vector.shape_cast %26 : vector<16xf32> to vector<1x16xf32>
    %cst_8 = arith.constant 1.000000e-30 : f32
    %28 = vector.broadcast %cst_8 : f32 to vector<1x16xf32>
    %29 = arith.addf %27, %28 : vector<1x16xf32>
    %30 = vector.broadcast %29 : vector<1x16xf32> to vector<16x16xf32>
    %31 = arith.divf %25, %30 : vector<16x16xf32>
    %cst_9 = arith.constant dense<0.000000e+00> : vector<16xf32>
    %32 = vector.multi_reduction <add>, %31, %cst_9 [1] : vector<16x16xf32> to vector<16xf32>
    %33 = vector.shape_cast %32 : vector<16xf32> to vector<16x1xf32>
    %cst_10 = arith.constant 1.000000e-30 : f32
    %34 = vector.broadcast %cst_10 : f32 to vector<16x1xf32>
    %35 = arith.addf %33, %34 : vector<16x1xf32>
    %36 = vector.broadcast %35 : vector<16x1xf32> to vector<16x16xf32>
    %37 = arith.divf %31, %36 : vector<16x16xf32>
    %cst_11 = arith.constant dense<0.000000e+00> : vector<16xf32>
    %38 = vector.multi_reduction <add>, %37, %cst_11 [0] : vector<16x16xf32> to vector<16xf32>
    %39 = vector.shape_cast %38 : vector<16xf32> to vector<1x16xf32>
    %cst_12 = arith.constant 1.000000e-30 : f32
    %40 = vector.broadcast %cst_12 : f32 to vector<1x16xf32>
    %41 = arith.addf %39, %40 : vector<1x16xf32>
    %42 = vector.broadcast %41 : vector<1x16xf32> to vector<16x16xf32>
    %43 = arith.divf %37, %42 : vector<16x16xf32>
    %cst_13 = arith.constant dense<0.000000e+00> : vector<16xf32>
    %44 = vector.multi_reduction <add>, %43, %cst_13 [1] : vector<16x16xf32> to vector<16xf32>
    %45 = vector.shape_cast %44 : vector<16xf32> to vector<16x1xf32>
    %cst_14 = arith.constant 1.000000e-30 : f32
    %46 = vector.broadcast %cst_14 : f32 to vector<16x1xf32>
    %47 = arith.addf %45, %46 : vector<16x1xf32>
    %48 = vector.broadcast %47 : vector<16x1xf32> to vector<16x16xf32>
    %49 = arith.divf %43, %48 : vector<16x16xf32>
    %cst_15 = arith.constant dense<0.000000e+00> : vector<16xf32>
    %50 = vector.multi_reduction <add>, %49, %cst_15 [0] : vector<16x16xf32> to vector<16xf32>
    %51 = vector.shape_cast %50 : vector<16xf32> to vector<1x16xf32>
    %cst_16 = arith.constant 1.000000e-30 : f32
    %52 = vector.broadcast %cst_16 : f32 to vector<1x16xf32>
    %53 = arith.addf %51, %52 : vector<1x16xf32>
    %54 = vector.broadcast %53 : vector<1x16xf32> to vector<16x16xf32>
    %55 = arith.divf %49, %54 : vector<16x16xf32>
    %cst_17 = arith.constant dense<0.000000e+00> : vector<16x16xf32>
    %56 = tpu.matmul %55, %19, %cst_17 {dimension_numbers = #tpu.dot_dimension_numbers<[1], [1], [0], [0], [0, 0, 1, 0], [], []>} : vector<16x16xf32>, vector<16x16xf32>, vector<16x16xf32> -> vector<16x16xf32>
    %cst_18 = arith.constant dense<0.000000e+00> : vector<16x16xf32>
    %57 = tpu.matmul %56, %55, %cst_18 {dimension_numbers = #tpu.dot_dimension_numbers<[1], [1], [0], [0], [0, 0, 1, 0], [], []>} : vector<16x16xf32>, vector<16x16xf32>, vector<16x16xf32> -> vector<16x16xf32>
    %c0_19 = arith.constant 0 : index
    %c0_20 = arith.constant 0 : index
    %58 = vector.load %arg2[%c0_19, %c0_20] : memref<16x16xf32, #tpu.memory_space<vmem>>, vector<16x16xf32>
    %59 = arith.mulf %58, %57 : vector<16x16xf32>
    %c0_21 = arith.constant 0 : index
    %c0_22 = arith.constant 0 : index
    %60 = vector.load %arg4[%c0_21, %c0_22] : memref<16x16xf32, #tpu.memory_space<vmem>>, vector<16x16xf32>
    %61 = arith.mulf %60, %57 : vector<16x16xf32>
    %c0_23 = arith.constant 0 : index
    %c0_24 = arith.constant 0 : index
    %62 = vector.load %arg6[%c0_23, %c0_24] : memref<16x16xf32, #tpu.memory_space<vmem>>, vector<16x16xf32>
    %63 = arith.mulf %62, %57 : vector<16x16xf32>
    %64 = tpu.concatenate %59, %61, %63 in 1 : vector<16x16xf32>, vector<16x16xf32>, vector<16x16xf32> -> vector<16x48xf32>
    %c0_25 = arith.constant 0 : index
    %c0_26 = arith.constant 0 : index
    %65 = vector.load %arg8[%c0_25, %c0_26] : memref<16x48xf32, #tpu.memory_space<vmem>>, vector<16x48xf32>
    tpu.vector_store %arg8[%c0_25, %c0_26], %64 {strides = array<i32>} : memref<16x48xf32, #tpu.memory_space<vmem>>, vector<16x48xf32>,
    %c0_27 = arith.constant 0 : index
    %c0_28 = arith.constant 0 : index
    %66 = vector.load %arg3[%c0_27, %c0_28] : memref<16x16xf32, #tpu.memory_space<vmem>>, vector<16x16xf32>
    %67 = arith.mulf %66, %57 : vector<16x16xf32>
    %c0_29 = arith.constant 0 : index
    %c0_30 = arith.constant 0 : index
    %68 = vector.load %arg5[%c0_29, %c0_30] : memref<16x16xf32, #tpu.memory_space<vmem>>, vector<16x16xf32>
    %69 = arith.mulf %68, %57 : vector<16x16xf32>
    %70 = tpu.concatenate %67, %69 in 1 : vector<16x16xf32>, vector<16x16xf32> -> vector<16x32xf32>
    %c0_31 = arith.constant 0 : index
    %c0_32 = arith.constant 0 : index
    %71 = vector.load %arg9[%c0_31, %c0_32] : memref<16x32xf32, #tpu.memory_space<vmem>>, vector<16x32xf32>
    tpu.vector_store %arg9[%c0_31, %c0_32], %70 {strides = array<i32>} : memref<16x32xf32, #tpu.memory_space<vmem>>, vector<16x32xf32>,
    %c0_33 = arith.constant 0 : index
    %c0_34 = arith.constant 0 : index
    %72 = vector.load %arg7[%c0_33, %c0_34] : memref<16x16xf32, #tpu.memory_space<vmem>>, vector<16x16xf32>
    %73 = arith.mulf %72, %57 : vector<16x16xf32>
    %c0_35 = arith.constant 0 : index
    %c0_36 = arith.constant 0 : index
    %74 = vector.load %arg10[%c0_35, %c0_36] : memref<16x16xf32, #tpu.memory_space<vmem>>, vector<16x16xf32>
    tpu.vector_store %arg10[%c0_35, %c0_36], %73 {strides = array<i32>} : memref<16x16xf32, #tpu.memory_space<vmem>>, vector<16x16xf32>,
    return
  }
}

</mosaic_0001>

<llo_original>
// kernel: tpu_custom_call.1
$region0: #{tpu_custom_call.1}
  #allocation0 [shape = 'u32[]', space=smem, size = 0x4, offset = 0x4, fixed_abs, tag = 'smem constant byte address 0x4 - core index']
  #allocation1 [shape = 'u32[144,128]{1,0:T(1,128)}', space=vmem, size = 0x12000, scoped, tag = 'internal scratch']
  %s0 = inlined_call_operand.hbm [shape: f32[16,16], index: 0, kind: input, shape index: {}]
  %s1 = inlined_call_operand.hbm [shape: f32[16,16], index: 1, kind: input, shape index: {}]
  %s2 = inlined_call_operand.hbm [shape: f32[16,16], index: 2, kind: input, shape index: {}]
  %s3 = inlined_call_operand.hbm [shape: f32[16,16], index: 3, kind: input, shape index: {}]
  %s4 = inlined_call_operand.hbm [shape: f32[16,16], index: 4, kind: input, shape index: {}]
  %s5 = inlined_call_operand.vmem [shape: f32[16,16], index: 5, kind: input, shape index: {}]
  %s6 = inlined_call_operand.hbm [shape: f32[16,16], index: 6, kind: input, shape index: {}]
  %s7 = inlined_call_operand.hbm [shape: f32[16,16], index: 7, kind: input, shape index: {}]
  %s8 = inlined_call_operand.hbm [shape: f32[16,48], index: 8, kind: output, shape index: {0}]
  %s9 = inlined_call_operand.hbm [shape: f32[16,32], index: 9, kind: output, shape index: {1}]
  %s10 = inlined_call_operand.hbm [shape: f32[16,16], index: 10, kind: output, shape index: {2}]
  %11 = xla_tuple %s8, %s9, %s10
  %s12 = sld [smem:[#allocation0]]
  $region86: #{tpu_custom_call.1} parent=0
    _
  %s14 = ssub.s32 1, %s12
  %s15 = scalar_select 0, %s14, %s12
  $region1: #{tpu_custom_call.1} parent=0
    #allocation2 [shape = 'u8[8192]{0}', space=vmem, size = 0x2000, scoped, tag = 'input window, operand 0, single buffered']
    #allocation3 [shape = 's32[1]{0}', space=sflag, size = 0x4, scoped, tag = 'scoped memory for tpu_custom_call.1']
    #allocation4 [shape = 's32[1]{0}', space=sflag, size = 0x4, scoped, tag = 'scoped memory for tpu_custom_call.1']
    #allocation5 [shape = 'u8[8192]{0}', space=vmem, size = 0x2000, scoped, tag = 'input window, operand 1, single buffered']
    #allocation6 [shape = 's32[1]{0}', space=sflag, size = 0x4, scoped, tag = 'scoped memory for tpu_custom_call.1']
    #allocation7 [shape = 'u8[8192]{0}', space=vmem, size = 0x2000, scoped, tag = 'input window, operand 2, single buffered']
    #allocation8 [shape = 'u8[8192]{0}', space=vmem, size = 0x2000, scoped, tag = 'input window, operand 3, single buffered']
    #allocation9 [shape = 's32[1]{0}', space=sflag, size = 0x4, scoped, tag = 'scoped memory for tpu_custom_call.1']
    #allocation10 [shape = 'u8[8192]{0}', space=vmem, size = 0x2000, scoped, tag = 'input window, operand 4, single buffered']
    #allocation11 [shape = 'u8[8192]{0}', space=vmem, size = 0x2000, scoped, tag = 'input window, operand 6, single buffered']
    #allocation12 [shape = 's32[1]{0}', space=sflag, size = 0x4, scoped, tag = 'scoped memory for tpu_custom_call.1']
    #allocation13 [shape = 'u8[8192]{0}', space=vmem, size = 0x2000, scoped, tag = 'input window, operand 7, single buffered']
    #allocation14 [shape = 'u8[8192]{0}', space=vmem, size = 0x2000, scoped, tag = 'output window, operand 0, single buffered']
    #allocation15 [shape = 'u8[8192]{0}', space=vmem, size = 0x2000, scoped, tag = 'output window, operand 1, single buffered']
    #allocation16 [shape = 's32[1]{0}', space=sflag, size = 0x4, scoped, tag = 'scoped memory for tpu_custom_call.1']
    #allocation17 [shape = 'u8[8192]{0}', space=vmem, size = 0x2000, scoped, tag = 'output window, operand 2, single buffered']
    %16 = vsyncpa [#allocation3], 0
    %17 = vsyncpa [#allocation6], 0
    %18 = vsyncpa [#allocation9], 0
    %19 = vsyncpa [#allocation12], 0
    %20 = vsyncpa [#allocation4], 0
    %21 = vsyncpa [#allocation16], 0
    // Predicated region
    $region2: #{tpu_custom_call.1} parent=1 // pred_check
      _
    $region3: #{tpu_custom_call.1} parent=1 // pred_check_branch
      %23 = sbr.rel (0) target = $region5
    $region4: #{tpu_custom_call.1} parent=1 // pred_region
      %s25 = ssub.s32 256, 256
      %26 = vsyncadd [#allocation3], %s25
      %s27 = sshll.u32 [#allocation2], 4
      %s28 = int_to_ptr.vmem [resolvable:$true] %s27
      %33 = dma.hbm_to_vmem [thread:$0]  %s0, 256, %s28, [#allocation3], 128, 128, 8
    $region5: #{tpu_custom_call.1} parent=1 // pred_fallthru
      _
    // Predicated region
    $region6: #{tpu_custom_call.1} parent=1 // pred_check
      _
    $region7: #{tpu_custom_call.1} parent=1 // pred_check_branch
      %35 = sbr.rel (0) target = $region9
    $region8: #{tpu_custom_call.1} parent=1 // pred_region
      %s37 = ssub.s32 256, 256
      %38 = vsyncadd [#allocation6], %s37
      %s39 = sshll.u32 [#allocation5], 4
      %s40 = int_to_ptr.vmem [resolvable:$true] %s39
      %45 = dma.hbm_to_vmem [thread:$0]  %s1, 256, %s40, [#allocation6], 128, 128, 8
    $region9: #{tpu_custom_call.1} parent=1 // pred_fallthru
      _
    // Predicated region
    $region10: #{tpu_custom_call.1} parent=1 // pred_check
      _
    $region11: #{tpu_custom_call.1} parent=1 // pred_check_branch
      %47 = sbr.rel (0) target = $region13
    $region12: #{tpu_custom_call.1} parent=1 // pred_region
      %s49 = ssub.s32 256, 256
      %50 = vsyncadd [#allocation6], %s49
      %s51 = sshll.u32 [#allocation7], 4
      %s52 = int_to_ptr.vmem [resolvable:$true] %s51
      %57 = dma.hbm_to_vmem [thread:$0]  %s2, 256, %s52, [#allocation6], 128, 128, 8
    $region13: #{tpu_custom_call.1} parent=1 // pred_fallthru
      _
    // Predicated region
    $region14: #{tpu_custom_call.1} parent=1 // pred_check
      _
    $region15: #{tpu_custom_call.1} parent=1 // pred_check_branch
      %59 = sbr.rel (0) target = $region17
    $region16: #{tpu_custom_call.1} parent=1 // pred_region
      %s61 = ssub.s32 256, 256
      %62 = vsyncadd [#allocation9], %s61
      %s63 = sshll.u32 [#allocation8], 4
      %s64 = int_to_ptr.vmem [resolvable:$true] %s63
      %69 = dma.hbm_to_vmem [thread:$0]  %s3, 256, %s64, [#allocation9], 128, 128, 8
    $region17: #{tpu_custom_call.1} parent=1 // pred_fallthru
      _
    // Predicated region
    $region18: #{tpu_custom_call.1} parent=1 // pred_check
      _
    $region19: #{tpu_custom_call.1} parent=1 // pred_check_branch
      %71 = sbr.rel (0) target = $region21
    $region20: #{tpu_custom_call.1} parent=1 // pred_region
      %s73 = ssub.s32 256, 256
      %74 = vsyncadd [#allocation9], %s73
      %s75 = sshll.u32 [#allocation10], 4
      %s76 = int_to_ptr.vmem [resolvable:$true] %s75
      %81 = dma.hbm_to_vmem [thread:$0]  %s4, 256, %s76, [#allocation9], 128, 128, 8
    $region21: #{tpu_custom_call.1} parent=1 // pred_fallthru
      _
    // Predicated region
    $region22: #{tpu_custom_call.1} parent=1 // pred_check
      _
    $region23: #{tpu_custom_call.1} parent=1 // pred_check_branch
      %83 = sbr.rel (0) target = $region25
    $region24: #{tpu_custom_call.1} parent=1 // pred_region
      _
    $region25: #{tpu_custom_call.1} parent=1 // pred_fallthru
      _
    // Predicated region
    $region26: #{tpu_custom_call.1} parent=1 // pred_check
      _
    $region27: #{tpu_custom_call.1} parent=1 // pred_check_branch
      %85 = sbr.rel (0) target = $region29
    $region28: #{tpu_custom_call.1} parent=1 // pred_region
      %s87 = ssub.s32 256, 256
      %88 = vsyncadd [#allocation12], %s87
      %s89 = sshll.u32 [#allocation11], 4
      %s90 = int_to_ptr.vmem [resolvable:$true] %s89
      %95 = dma.hbm_to_vmem [thread:$0]  %s6, 256, %s90, [#allocation12], 128, 128, 8
    $region29: #{tpu_custom_call.1} parent=1 // pred_fallthru
      _
    // Predicated region
    $region30: #{tpu_custom_call.1} parent=1 // pred_check
      _
    $region31: #{tpu_custom_call.1} parent=1 // pred_check_branch
      %97 = sbr.rel (0) target = $region33
    $region32: #{tpu_custom_call.1} parent=1 // pred_region
      %s99 = ssub.s32 256, 256
      %100 = vsyncadd [#allocation12], %s99
      %s101 = sshll.u32 [#allocation13], 4
      %s102 = int_to_ptr.vmem [resolvable:$true] %s101
      %107 = dma.hbm_to_vmem [thread:$0]  %s7, 256, %s102, [#allocation12], 128, 128, 8
    $region33: #{tpu_custom_call.1} parent=1 // pred_fallthru
      _
    // Predicated region
    $region34: #{tpu_custom_call.1} parent=1 // pred_check
      _
    $region35: #{tpu_custom_call.1} parent=1 // pred_check_branch
      %109 = sbr.rel (0) target = $region37
    $region36: #{tpu_custom_call.1} parent=1 // pred_region
      %110 = dma.done [#allocation3], 256
    $region37: #{tpu_custom_call.1} parent=1 // pred_fallthru
      _
    // Predicated region
    $region38: #{tpu_custom_call.1} parent=1 // pred_check
      _
    $region39: #{tpu_custom_call.1} parent=1 // pred_check_branch
      %112 = sbr.rel (0) target = $region41
    $region40: #{tpu_custom_call.1} parent=1 // pred_region
      %113 = dma.done [#allocation6], 256
    $region41: #{tpu_custom_call.1} parent=1 // pred_fallthru
      _
    // Predicated region
    $region42: #{tpu_custom_call.1} parent=1 // pred_check
      _
    $region43: #{tpu_custom_call.1} parent=1 // pred_check_branch
      %115 = sbr.rel (0) target = $region45
    $region44: #{tpu_custom_call.1} parent=1 // pred_region
      %116 = dma.done [#allocation6], 256
    $region45: #{tpu_custom_call.1} parent=1 // pred_fallthru
      _
    // Predicated region
    $region46: #{tpu_custom_call.1} parent=1 // pred_check
      _
    $region47: #{tpu_custom_call.1} parent=1 // pred_check_branch
      %118 = sbr.rel (0) target = $region49
    $region48: #{tpu_custom_call.1} parent=1 // pred_region
      %119 = dma.done [#allocation9], 256
    $region49: #{tpu_custom_call.1} parent=1 // pred_fallthru
      _
    // Predicated region
    $region50: #{tpu_custom_call.1} parent=1 // pred_check
      _
    $region51: #{tpu_custom_call.1} parent=1 // pred_check_branch
      %121 = sbr.rel (0) target = $region53
    $region52: #{tpu_custom_call.1} parent=1 // pred_region
      %122 = dma.done [#allocation9], 256
    $region53: #{tpu_custom_call.1} parent=1 // pred_fallthru
      _
    // Predicated region
    $region54: #{tpu_custom_call.1} parent=1 // pred_check
      _
    $region55: #{tpu_custom_call.1} parent=1 // pred_check_branch
      %124 = sbr.rel (0) target = $region57
    $region56: #{tpu_custom_call.1} parent=1 // pred_region
      %125 = dma.done [#allocation12], 256
    $region57: #{tpu_custom_call.1} parent=1 // pred_fallthru
      _
    // Predicated region
    $region58: #{tpu_custom_call.1} parent=1 // pred_check
      _
    $region59: #{tpu_custom_call.1} parent=1 // pred_check_branch
      %127 = sbr.rel (0) target = $region61
    $region60: #{tpu_custom_call.1} parent=1 // pred_region
      %128 = dma.done [#allocation12], 256
    $region61: #{tpu_custom_call.1} parent=1 // pred_fallthru
      _
    %v129 = vld [vmem:[#allocation2] sm:$0xff]
    %v130 = vld [vmem:[#allocation2 + $0x8] sm:$0xff]
    %vm131 = vcmask 130048
    %v132 = vsel %vm131, %v129, -inf
    %133 = vmax.xlane.f32.xlu0 %v132
    %v134 = vpop.xlane.xlu0 %133
    %v135 = vsel %vm131, %v130, -inf
    %136 = vmax.xlane.f32.xlu0 %v135
    %v137 = vpop.xlane.xlu0 %136
    %v138 = vsub.f32 %v129, %v134
    %v139 = vsub.f32 %v130, %v137
    %v140 = vmul.f32 %v138, 2.0
    %v141 = vmul.f32 %v139, 2.0
    %v142 = vmul.f32 %v140, 1.442695
    %v143 = vpow.pop %v142
    %v144 = vmul.f32 %v141, 1.442695
    %v145 = vpow.pop %v144
    %v146 = vlaneseq
    %v147 = vshrl.u32 %v146, 7
    %v148 = vadd.s32 %v147, 8
    %v149 = vlaneseq
    %v150 = vand.u32 %v149, 127
    %vm151 = vcmp.ge.s32.totalorder %v147, %v150
    %vm152 = vcmp.ge.s32.totalorder %v148, %v150
    %v153 = vsel %vm151, 1, 0
    %v154 = vsel %vm152, 1, 0
    %v155 = vcvt.s32.f32 %v153
    %v156 = vcvt.s32.f32 %v154
    %v157 = vld [vmem:[#allocation5] sm:$0xff]
    %v158 = vld [vmem:[#allocation5 + $0x8] sm:$0xff]
    %v159 = vxor.u32 %v157, 2147483648
    %v160 = vxor.u32 %v158, 2147483648
    %v161 = vmul.f32 %v159, 1.442695
    %v162 = vpow.pop %v161
    %v163 = vmul.f32 %v160, 1.442695
    %v164 = vpow.pop %v163
    %v165 = vadd.f32 %v162, 1.0
    %v166 = vadd.f32 %v164, 1.0
    %v167 = vrcp.pop %v165
    %v168 = vmul.f32 1.0, %v167
    %v169 = vrcp.pop %v166
    %v170 = vmul.f32 1.0, %v169
    %v171 = vmul.f32 %v168, %v155
    %v172 = vmul.f32 %v170, %v156
    %v173 = vsel %vm131, %v143, 0.0
    %174 = vadd.xlane.f32.xlu0 %v173
    %v175 = vpop.xlane.xlu0 %174
    %v176 = vsel %vm131, %v145, 0.0
    %177 = vadd.xlane.f32.xlu0 %v176
    %v178 = vpop.xlane.xlu0 %177
    %v179 = vadd.f32 %v175, 1e-30
    %v180 = vadd.f32 %v178, 1e-30
    %v181 = vrcp.pop %v179
    %v182 = vmul.f32 %v143, %v181
    %v183 = vrcp.pop %v180
    %v184 = vmul.f32 %v145, %v183
    %v185 = vsel %vm131, %v182, 0.0
    %v186 = vsel %vm131, %v184, 0.0
    %v187 = vadd.f32 %v185, %v186
    %v188 = vrot.slane %v187, 4
    %v189 = vadd.f32 %v187, %v188
    %v190 = vrot.slane %v189, 2
    %v191 = vadd.f32 %v189, %v190
    %v192 = vrot.slane %v191, 1
    %v193 = vadd.f32 %v191, %v192
    %v194 = vadd.f32 %v193, 1e-30
    %v195 = vrcp.pop %v194
    %v196 = vmul.f32 %v182, %v195
    %v197 = vmul.f32 %v184, %v195
    %v198 = vsel %vm131, %v196, 0.0
    %199 = vadd.xlane.f32.xlu0 %v198
    %v200 = vpop.xlane.xlu0 %199
    %v201 = vsel %vm131, %v197, 0.0
    %202 = vadd.xlane.f32.xlu0 %v201
    %v203 = vpop.xlane.xlu0 %202
    %v204 = vadd.f32 %v200, 1e-30
    %v205 = vadd.f32 %v203, 1e-30
    %v206 = vrcp.pop %v204
    %v207 = vmul.f32 %v196, %v206
    %v208 = vrcp.pop %v205
    %v209 = vmul.f32 %v197, %v208
    %v210 = vsel %vm131, %v207, 0.0
    %v211 = vsel %vm131, %v209, 0.0
    %v212 = vadd.f32 %v210, %v211
    %v213 = vrot.slane %v212, 4
    %v214 = vadd.f32 %v212, %v213
    %v215 = vrot.slane %v214, 2
    %v216 = vadd.f32 %v214, %v215
    %v217 = vrot.slane %v216, 1
    %v218 = vadd.f32 %v216, %v217
    %v219 = vadd.f32 %v218, 1e-30
    %v220 = vrcp.pop %v219
    %v221 = vmul.f32 %v207, %v220
    %v222 = vmul.f32 %v209, %v220
    %v223 = vsel %vm131, %v221, 0.0
    %224 = vadd.xlane.f32.xlu0 %v223
    %v225 = vpop.xlane.xlu0 %224
    %v226 = vsel %vm131, %v222, 0.0
    %227 = vadd.xlane.f32.xlu0 %v226
    %v228 = vpop.xlane.xlu0 %227
    %v229 = vadd.f32 %v225, 1e-30
    %v230 = vadd.f32 %v228, 1e-30
    %v231 = vrcp.pop %v229
    %v232 = vmul.f32 %v221, %v231
    %v233 = vrcp.pop %v230
    %v234 = vmul.f32 %v222, %v233
    %v235 = vsel %vm131, %v232, 0.0
    %v236 = vsel %vm131, %v234, 0.0
    %v237 = vadd.f32 %v235, %v236
    %v238 = vrot.slane %v237, 4
    %v239 = vadd.f32 %v237, %v238
    %v240 = vrot.slane %v239, 2
    %v241 = vadd.f32 %v239, %v240
    %v242 = vrot.slane %v241, 1
    %v243 = vadd.f32 %v241, %v242
    %v244 = vadd.f32 %v243, 1e-30
    %v245 = vrcp.pop %v244
    %v246 = vmul.f32 %v232, %v245
    %v247 = vmul.f32 %v234, %v245
    %v249 = vsel %vm131, %v246, 0
    %v252 = vsel %vm131, %v247, 0
    %v255 = vsel %vm131, %v171, 0
    %v258 = vsel %vm131, %v172, 0
    %260 = vmatprep.subr.mxu0 0.0
    %261 = vmatpush1.xpose.msra.mxu0 %v255
    %262 = vmatprep.subr.mxu0 0.0
    %263 = vmatpush1.xpose.msra.mxu0 %v258
    %264 = vmatprep.subr.mxu0 0.0
    %265 = vmatpush1.xpose.msra.mxu0 0.0
    %266 = vmatprep.subr.mxu0 0.0
    %267 = vmatpush1.xpose.msra.mxu0 0.0
    %268 = vmatprep.subr.mxu0 0.0
    %269 = vmatpush1.xpose.msra.mxu0 0.0
    %270 = vmatprep.subr.mxu0 0.0
    %271 = vmatpush1.xpose.msra.mxu0 0.0
    %272 = vmatprep.subr.mxu0 0.0
    %273 = vmatpush1.xpose.msra.mxu0 0.0
    %274 = vmatprep.subr.mxu0 0.0
    %275 = vmatpush1.xpose.msra.mxu0 0.0
    %276 = vmatprep.subr.mxu0 0.0
    %277 = vmatpush1.xpose.msra.mxu0 0.0
    %278 = vmatprep.subr.mxu0 0.0
    %279 = vmatpush1.xpose.msra.mxu0 0.0
    %280 = vmatprep.subr.mxu0 0.0
    %281 = vmatpush1.xpose.msra.mxu0 0.0
    %282 = vmatprep.subr.mxu0 0.0
    %283 = vmatpush1.xpose.msra.mxu0 0.0
    %284 = vmatprep.subr.mxu0 0.0
    %285 = vmatpush1.xpose.msra.mxu0 0.0
    %286 = vmatprep.subr.mxu0 0.0
    %287 = vmatpush1.xpose.msra.mxu0 0.0
    %288 = vmatprep.subr.mxu0 0.0
    %289 = vmatpush1.xpose.msra.mxu0 0.0
    %290 = vmatprep.subr.mxu0 0.0
    %291 = vmatpush1.xpose.msra.mxu0 0.0
    %292 = vmatprep.subr.mxu0 0.0
    %293 = vmatpush1.xpose.msra.mxu0 0.0
    %294 = vmatprep.subr.mxu0 0.0
    %295 = vmatpush1.xpose.msra.mxu0 0.0
    %296 = vmatprep.subr.mxu0 0.0
    %297 = vmatpush1.xpose.msra.mxu0 0.0
    %298 = vmatprep.subr.mxu0 0.0
    %299 = vmatpush1.xpose.msra.mxu0 0.0
    %300 = vmatprep.subr.mxu0 0.0
    %301 = vmatpush1.xpose.msra.mxu0 0.0
    %302 = vmatprep.subr.mxu0 0.0
    %303 = vmatpush1.xpose.msra.mxu0 0.0
    %304 = vmatprep.subr.mxu0 0.0
    %305 = vmatpush1.xpose.msra.mxu0 0.0
    %306 = vmatprep.subr.mxu0 0.0
    %307 = vmatpush1.xpose.msra.mxu0 0.0
    %308 = vmatprep.subr.mxu0 0.0
    %309 = vmatpush1.xpose.msra.mxu0 0.0
    %310 = vmatprep.subr.mxu0 0.0
    %311 = vmatpush1.xpose.msra.mxu0 0.0
    %312 = vmatprep.subr.mxu0 0.0
    %313 = vmatpush1.xpose.msra.mxu0 0.0
    %314 = vmatprep.subr.mxu0 0.0
    %315 = vmatpush1.xpose.msra.mxu0 0.0
    %316 = vmatprep.subr.mxu0 0.0
    %317 = vmatpush1.xpose.msra.mxu0 0.0
    %318 = vmatprep.subr.mxu0 0.0
    %319 = vmatpush1.xpose.msra.mxu0 0.0
    %320 = vmatprep.subr.mxu0 0.0
    %321 = vmatpush1.xpose.msra.mxu0 0.0
    %322 = vmatprep.subr.mxu0 0.0
    %323 = vmatpush1.xpose.msra.mxu0 0.0
    %324 = vmatprep.mubr.f32.mxu0 0.0
    %325 = vmatmul.mubr.f32.gmra.mrb[0].mxu0 %v249
    %v326 = vpop.f32.mrb[0].mxu0
    %v327 = vadd.f32 0.0, %v326
    %v328 = vpop.f32.mrb[0].mxu0
    %329 = vmatprep.mubr.f32.mxu0 0.0
    %330 = vmatmul.mubr.f32.gmra.mrb[0].mxu0 %v252
    %v331 = vpop.f32.mrb[0].mxu0
    %v332 = vadd.f32 0.0, %v331
    %v333 = vpop.f32.mrb[0].mxu0
    %334 = vdwg.mxu0
    %v336 = vsel %vm131, %v327, 0
    %v339 = vsel %vm131, %v332, 0
    %341 = vmatprep.subr.mxu0 0.0
    %342 = vmatpush1.xpose.msra.mxu0 %v249
    %343 = vmatprep.subr.mxu0 0.0
    %344 = vmatpush1.xpose.msra.mxu0 %v252
    %345 = vmatprep.subr.mxu0 0.0
    %346 = vmatpush1.xpose.msra.mxu0 0.0
    %347 = vmatprep.subr.mxu0 0.0
    %348 = vmatpush1.xpose.msra.mxu0 0.0
    %349 = vmatprep.subr.mxu0 0.0
    %350 = vmatpush1.xpose.msra.mxu0 0.0
    %351 = vmatprep.subr.mxu0 0.0
    %352 = vmatpush1.xpose.msra.mxu0 0.0
    %353 = vmatprep.subr.mxu0 0.0
    %354 = vmatpush1.xpose.msra.mxu0 0.0
    %355 = vmatprep.subr.mxu0 0.0
    %356 = vmatpush1.xpose.msra.mxu0 0.0
    %357 = vmatprep.subr.mxu0 0.0
    %358 = vmatpush1.xpose.msra.mxu0 0.0
    %359 = vmatprep.subr.mxu0 0.0
    %360 = vmatpush1.xpose.msra.mxu0 0.0
    %361 = vmatprep.subr.mxu0 0.0
    %362 = vmatpush1.xpose.msra.mxu0 0.0
    %363 = vmatprep.subr.mxu0 0.0
    %364 = vmatpush1.xpose.msra.mxu0 0.0
    %365 = vmatprep.subr.mxu0 0.0
    %366 = vmatpush1.xpose.msra.mxu0 0.0
    %367 = vmatprep.subr.mxu0 0.0
    %368 = vmatpush1.xpose.msra.mxu0 0.0
    %369 = vmatprep.subr.mxu0 0.0
    %370 = vmatpush1.xpose.msra.mxu0 0.0
    %371 = vmatprep.subr.mxu0 0.0
    %372 = vmatpush1.xpose.msra.mxu0 0.0
    %373 = vmatprep.subr.mxu0 0.0
    %374 = vmatpush1.xpose.msra.mxu0 0.0
    %375 = vmatprep.subr.mxu0 0.0
    %376 = vmatpush1.xpose.msra.mxu0 0.0
    %377 = vmatprep.subr.mxu0 0.0
    %378 = vmatpush1.xpose.msra.mxu0 0.0
    %379 = vmatprep.subr.mxu0 0.0
    %380 = vmatpush1.xpose.msra.mxu0 0.0
    %381 = vmatprep.subr.mxu0 0.0
    %382 = vmatpush1.xpose.msra.mxu0 0.0
    %383 = vmatprep.subr.mxu0 0.0
    %384 = vmatpush1.xpose.msra.mxu0 0.0
    %385 = vmatprep.subr.mxu0 0.0
    %386 = vmatpush1.xpose.msra.mxu0 0.0
    %387 = vmatprep.subr.mxu0 0.0
    %388 = vmatpush1.xpose.msra.mxu0 0.0
    %389 = vmatprep.subr.mxu0 0.0
    %390 = vmatpush1.xpose.msra.mxu0 0.0
    %391 = vmatprep.subr.mxu0 0.0
    %392 = vmatpush1.xpose.msra.mxu0 0.0
    %393 = vmatprep.subr.mxu0 0.0
    %394 = vmatpush1.xpose.msra.mxu0 0.0
    %395 = vmatprep.subr.mxu0 0.0
    %396 = vmatpush1.xpose.msra.mxu0 0.0
    %397 = vmatprep.subr.mxu0 0.0
    %398 = vmatpush1.xpose.msra.mxu0 0.0
    %399 = vmatprep.subr.mxu0 0.0
    %400 = vmatpush1.xpose.msra.mxu0 0.0
    %401 = vmatprep.subr.mxu0 0.0
    %402 = vmatpush1.xpose.msra.mxu0 0.0
    %403 = vmatprep.subr.mxu0 0.0
    %404 = vmatpush1.xpose.msra.mxu0 0.0
    %405 = vmatprep.mubr.f32.mxu0 0.0
    %406 = vmatmul.mubr.f32.gmra.mrb[0].mxu0 %v336
    %v407 = vpop.f32.mrb[0].mxu0
    %v408 = vadd.f32 0.0, %v407
    %v409 = vpop.f32.mrb[0].mxu0
    %410 = vmatprep.mubr.f32.mxu0 0.0
    %411 = vmatmul.mubr.f32.gmra.mrb[0].mxu0 %v339
    %v412 = vpop.f32.mrb[0].mxu0
    %v413 = vadd.f32 0.0, %v412
    %v414 = vpop.f32.mrb[0].mxu0
    %415 = vdwg.mxu0
    %v416 = vld [vmem:[#allocation7] sm:$0xff]
    %v417 = vld [vmem:[#allocation7 + $0x8] sm:$0xff]
    %v418 = vmul.f32 %v416, %v408
    %v419 = vmul.f32 %v417, %v413
    %v420 = vld [vmem:[#allocation10] sm:$0xff]
    %v421 = vld [vmem:[#allocation10 + $0x8] sm:$0xff]
    %v422 = vmul.f32 %v420, %v408
    %v423 = vmul.f32 %v421, %v413
    %v424 = vld [vmem:[#allocation11] sm:$0xff]
    %v425 = vld [vmem:[#allocation11 + $0x8] sm:$0xff]
    %v426 = vmul.f32 %v424, %v408
    %v427 = vmul.f32 %v425, %v413
    %430 = vrot.lane.b32.xlu0 %v422, 16
    %v431 = vpop.permute.xlu0 %430
    %432 = vrot.lane.b32.xlu0 %v423, 16
    %v433 = vpop.permute.xlu0 %432
    %438 = vrot.lane.b32.xlu0 %v426, 32
    %v439 = vpop.permute.xlu0 %438
    %440 = vrot.lane.b32.xlu0 %v427, 32
    %v441 = vpop.permute.xlu0 %440
    %v444 = vsel %vm131, %v418, %v431
    %v445 = vsel %vm131, %v419, %v433
    %vm446 = vcmask 261120
    %v447 = vsel %vm446, %v444, %v439
    %v448 = vsel %vm446, %v445, %v441
    %vm449 = vcmask 392192
    %450 = vst.msk [vmem:[#allocation14] sm:$0xff] %vm449, %v447
    %451 = vst.msk [vmem:[#allocation14 + $0x8] sm:$0xff] %vm449, %v448
    %v452 = vld [vmem:[#allocation8] sm:$0xff]
    %v453 = vld [vmem:[#allocation8 + $0x8] sm:$0xff]
    %v454 = vmul.f32 %v452, %v408
    %v455 = vmul.f32 %v453, %v413
    %v456 = vld [vmem:[%s5] sm:$0xff]
    %v457 = vld [vmem:[%s5 + $0x8] sm:$0xff]
    %v458 = vmul.f32 %v456, %v408
    %v459 = vmul.f32 %v457, %v413
    %462 = vrot.lane.b32.xlu0 %v458, 16
    %v463 = vpop.permute.xlu0 %462
    %464 = vrot.lane.b32.xlu0 %v459, 16
    %v465 = vpop.permute.xlu0 %464
    %v468 = vsel %vm131, %v454, %v463
    %v469 = vsel %vm131, %v455, %v465
    %470 = vst.msk [vmem:[#allocation15] sm:$0xff] %vm446, %v468
    %471 = vst.msk [vmem:[#allocation15 + $0x8] sm:$0xff] %vm446, %v469
    %v472 = vld [vmem:[#allocation13] sm:$0xff]
    %v473 = vld [vmem:[#allocation13 + $0x8] sm:$0xff]
    %v474 = vmul.f32 %v472, %v408
    %v475 = vmul.f32 %v473, %v413
    %476 = vst.msk [vmem:[#allocation17] sm:$0xff] %vm131, %v474
    %477 = vst.msk [vmem:[#allocation17 + $0x8] sm:$0xff] %vm131, %v475
    // Predicated region
    $region62: #{tpu_custom_call.1} parent=1 // pred_check
      _
    $region63: #{tpu_custom_call.1} parent=1 // pred_check_branch
      %479 = sbr.rel (0) target = $region65
    $region64: #{tpu_custom_call.1} parent=1 // pred_region
      %s481 = ssub.s32 256, 256
      %482 = vsyncadd [#allocation4], %s481
      %s483 = sshll.u32 [#allocation14], 4
      %s484 = int_to_ptr.vmem [resolvable:$true] %s483
      %489 = dma.vmem_to_hbm [thread:$0]  %s484, 256, %s8, [#allocation4], 128, 128, 8
    $region65: #{tpu_custom_call.1} parent=1 // pred_fallthru
      _
    // Predicated region
    $region66: #{tpu_custom_call.1} parent=1 // pred_check
      _
    $region67: #{tpu_custom_call.1} parent=1 // pred_check_branch
      %491 = sbr.rel (0) target = $region69
    $region68: #{tpu_custom_call.1} parent=1 // pred_region
      %s493 = ssub.s32 256, 256
      %494 = vsyncadd [#allocation16], %s493
      %s495 = sshll.u32 [#allocation15], 4
      %s496 = int_to_ptr.vmem [resolvable:$true] %s495
      %501 = dma.vmem_to_hbm [thread:$0]  %s496, 256, %s9, [#allocation16], 128, 128, 8
    $region69: #{tpu_custom_call.1} parent=1 // pred_fallthru
      _
    // Predicated region
    $region70: #{tpu_custom_call.1} parent=1 // pred_check
      _
    $region71: #{tpu_custom_call.1} parent=1 // pred_check_branch
      %503 = sbr.rel (0) target = $region73
    $region72: #{tpu_custom_call.1} parent=1 // pred_region
      %s505 = ssub.s32 256, 256
      %506 = vsyncadd [#allocation16], %s505
      %s507 = sshll.u32 [#allocation17], 4
      %s508 = int_to_ptr.vmem [resolvable:$true] %s507
      %513 = dma.vmem_to_hbm [thread:$0]  %s508, 256, %s10, [#allocation16], 128, 128, 8
    $region73: #{tpu_custom_call.1} parent=1 // pred_fallthru
      _
    // Predicated region
    $region74: #{tpu_custom_call.1} parent=1 // pred_check
      _
    $region75: #{tpu_custom_call.1} parent=1 // pred_check_branch
      %515 = sbr.rel (0) target = $region77
    $region76: #{tpu_custom_call.1} parent=1 // pred_region
      %516 = dma.done [#allocation4], 256
    $region77: #{tpu_custom_call.1} parent=1 // pred_fallthru
      _
    // Predicated region
    $region78: #{tpu_custom_call.1} parent=1 // pred_check
      _
    $region79: #{tpu_custom_call.1} parent=1 // pred_check_branch
      %518 = sbr.rel (0) target = $region81
    $region80: #{tpu_custom_call.1} parent=1 // pred_region
      %519 = dma.done [#allocation16], 256
    $region81: #{tpu_custom_call.1} parent=1 // pred_fallthru
      _
    // Predicated region
    $region82: #{tpu_custom_call.1} parent=1 // pred_check
      _
    $region83: #{tpu_custom_call.1} parent=1 // pred_check_branch
      %521 = sbr.rel (0) target = $region85
    $region84: #{tpu_custom_call.1} parent=1 // pred_region
      %522 = dma.done [#allocation16], 256
    $region85: #{tpu_custom_call.1} parent=1 // pred_fallthru
      _
    %523 = vsyncpa [#allocation3], 1
    %524 = vsyncpa [#allocation6], 1
    %525 = vsyncpa [#allocation9], 1
    %526 = vsyncpa [#allocation12], 1
    %527 = vsyncpa [#allocation4], 1
    %528 = vsyncpa [#allocation16], 1

</llo_original>
